<compile_context>
chip_gen: v5e
topology: v5e:2x2
jax: 0.10.0
libtpu: 0.0.40
codegen_flags: <defaults>
</compile_context>

<pallas_src>
import functools

import jax
import jax.numpy as jnp
from jax.experimental import pallas as pl
from jax.experimental.pallas import tpu as pltpu


def _round_up(x, m):
    return (x + m - 1) // m * m


def _focal_loss_tile_kernel(gamma, n_total, tile_n, x_ref, t_ref, out_ref):
    """One row-tile: partial focal-loss sum over the valid rows of this tile."""
    pid = pl.program_id(0)

    xb = x_ref[...]                 # (TILE_N, C), NATIVE dtype -- no eager f32 upcast
    t = t_ref[...]                  # (TILE_N, 1) int32 class indices, assumed in [0, C)
    tn, c = xb.shape

    # Row max in native dtype (bf16 runs at 2x elems/vreg-op on v6e/v7x; max is exact).
    m = jnp.max(xb, axis=-1, keepdims=True)                               # (TILE_N, 1)

    # sum_k exp(x - m): the shifted block is consumed only inside this fused
    # sub/exp/sum chain; it is never a named, reused (TILE_N, C) temporary.
    sum_exp = jnp.sum(jnp.exp((xb - m).astype(jnp.float32)),
                      axis=-1, keepdims=True)                             # (TILE_N, 1)

    # Gather the target logit straight from the RAW block with a one-hot lane select
    # + cross-lane reduce (exact: the row sum touches exactly one nonzero element).
    # The iota is only (1, C); the broadcast against (TILE_N, 1) targets stays fused.
    cls_idx = jax.lax.broadcasted_iota(jnp.int32, (1, c), 1)
    tgt = jnp.sum(jnp.where(cls_idx == t, xb, jnp.array(0, dtype=xb.dtype)),
                  axis=-1, keepdims=True)                                 # (TILE_N, 1)

    # Per-row tail in f32 on (TILE_N, 1) vectors (negligible vs. the block work for C>=128).
    lse = m.astype(jnp.float32) + jnp.log(sum_exp)
    ce = jnp.maximum(lse - tgt.astype(jnp.float32), 0.0)                  # clamp fp rounding

    p_t = jnp.exp(-ce)
    one_m_pt = 1.0 - p_t
    if gamma == 2:
        mod = jnp.square(one_m_pt)                      # VPU multiply; no float pow
    elif float(gamma) == int(gamma):
        mod = jax.lax.integer_pow(one_m_pt, int(gamma))
    else:
        mod = jnp.power(jnp.maximum(one_m_pt, 0.0), jnp.float32(gamma))
    focal = mod * ce                                                      # (TILE_N, 1)

    # Zero the padded rows of a ragged final tile with a SELECT (not a multiply), so
    # NaN/Inf computed from unspecified padded HBM rows can never leak into the sum.
    row_id = pid * tile_n + jax.lax.broadcasted_iota(jnp.int32, (tn, 1), 0)
    focal = jnp.where(row_id < n_total, focal, 0.0)

    # Per-tile partial sum, replicated into a lane/sublane-dense (1, 8, 128) block.
    # Each grid step owns a distinct output block -> the grid axis stays parallel.
    out_ref[...] = jnp.broadcast_to(jnp.sum(focal), out_ref.shape)


def focal_loss(logits, targets, gamma=2, tile_n=None):
    """Focal loss, reduction='mean'. logits: (N, C) float, targets: (N,) int -> scalar f32."""
    n, c = logits.shape
    itemsize = jnp.dtype(logits.dtype).itemsize
    targets_2d = targets.astype(jnp.int32).reshape(n, 1)

    if tile_n is None:
        # ~4 MiB logits blocks (x2 double-buffered = 8 MiB) fit comfortably now that the
        # kernel keeps no full-block temporaries: v5e/v6e 16/32 MiB scoped defaults and
        # v7x's 64 MiB physical VMEM all have headroom.
        tile_n = (4 * 1024 * 1024) // max(c * itemsize, 1)
        tile_n = max(8, min(tile_n, 4096))
        # TODO(synk): for vocab-scale C where even 8 rows exceed the byte budget, add a
        # second grid axis over C with an online-LSE (flash-softmax) accumulator.
        if n > 8:
            # Keep at least 2 roughly balanced tiles so v7x's two TensorCores both get
            # work via the "parallel" grid axis; a no-op on single-TC v5e/v6e.
            tile_n = min(tile_n, _round_up((n + 1) // 2, 8))
    tile_n = min(_round_up(tile_n, 8), _round_up(n, 8))
    num_tiles = pl.cdiv(n, tile_n)

    kernel = functools.partial(_focal_loss_tile_kernel, gamma, n, tile_n)

    cost = pl.CostEstimate(
        flops=6 * n * c,                         # max/sub/compare/select + two reduces
        transcendentals=n * c + 2 * n,           # exp over the block + per-row log, exp(-ce)
        bytes_accessed=n * c * itemsize + n * 4 + num_tiles * 8 * 128 * 4,
    )

    partials = pl.pallas_call(
        kernel,
        out_shape=jax.ShapeDtypeStruct((num_tiles, 8, 128), jnp.float32),
        grid=(num_tiles,),
        in_specs=[
            pl.BlockSpec((tile_n, c), lambda i: (i, 0)),   # logits row-tile (pipelined)
            pl.BlockSpec((tile_n, 1), lambda i: (i, 0)),   # matching target rows
        ],
        out_specs=pl.BlockSpec((1, 8, 128), lambda i: (i, 0, 0)),
        compiler_params=pltpu.CompilerParams(
            dimension_semantics=("parallel",),
            vmem_limit_bytes=32 * 1024 * 1024,   # explicit; safe on v5e/v6e (128 MiB) and v7x (64 MiB)
        ),
        cost_estimate=cost,
    )(logits, targets_2d)

    # Tiny final reduction in JAX; multiply by the trace-time 1/N constant (mean).
    return jnp.sum(partials[:, 0, 0]) * (1.0 / n)


def _focal_loss_ref(logits, targets, gamma=2.0):
    logp = jax.nn.log_softmax(logits.astype(jnp.float32), axis=-1)
    ce = -jnp.take_along_axis(logp, targets.reshape(-1, 1).astype(jnp.int32), axis=-1)[:, 0]
    p_t = jnp.exp(-ce)
    return jnp.mean((1.0 - p_t) ** gamma * ce)


if __name__ == "__main__":
    key = jax.random.PRNGKey(0)
    k1, k2 = jax.random.split(key)

    # Small shapes consistent with a classification loss: N=200 rows, C=128 classes.
    N, C = 200, 128
    logits = jax.random.normal(k1, (N, C), dtype=jnp.float32)
    targets = jax.random.randint(k2, (N,), 0, C, dtype=jnp.int32)

    ref = _focal_loss_ref(logits, targets, gamma=2.0)

    # Explicit small tile -> 4 tiles with a ragged final tile (200 = 3*64 + 8); exercises
    # the padding mask and multi-tile partial-sum path.
    out = jax.block_until_ready(focal_loss(logits, targets, gamma=2, tile_n=64))
    assert jnp.allclose(out, ref, rtol=1e-5, atol=1e-5), (out, ref)

    # Auto tile sizing -> 2 balanced tiles (the v7x two-TensorCore split path).
    out_auto = jax.block_until_ready(focal_loss(logits, targets, gamma=2))
    assert jnp.allclose(out_auto, ref, rtol=1e-5, atol=1e-5), (out_auto, ref)

    print("KERNEL_OK")
</pallas_src>

<mosaic_0001>
module attributes {stable_mosaic.version = 11 : i64} {
  func.func @_focal_loss_tile_kernel(%arg0: i32, %arg1: memref<64x128xf32, #tpu.memory_space<vmem>>, %arg2: memref<64x1xi32, #tpu.memory_space<vmem>>, %arg3: memref<1x8x128xf32, #tpu.memory_space<vmem>>) attributes {dimension_semantics = [#tpu.dimension_semantics<parallel>], iteration_bounds = array<i64: 4>, scalar_prefetch = 0 : i64, scratch_operands = 0 : i64, tpu.core_type = #tpu.core_type<tc>, window_params = [{transform_indices = @transform_0, window_bounds = array<i64: 64, 128>}, {transform_indices = @transform_1, window_bounds = array<i64: 64, 1>}, {transform_indices = @transform_2, window_bounds = array<i64: 1, 8, 128>}]} {
    %c0 = arith.constant 0 : index
    %c0_0 = arith.constant 0 : index
    %0 = vector.load %arg1[%c0, %c0_0] : memref<64x128xf32, #tpu.memory_space<vmem>>, vector<64x128xf32>
    %c0_1 = arith.constant 0 : index
    %c0_2 = arith.constant 0 : index
    %1 = vector.load %arg2[%c0_1, %c0_2] : memref<64x1xi32, #tpu.memory_space<vmem>>, vector<64x1xi32>
    %cst = arith.constant dense<0xFF800000> : vector<64xf32>
    %2 = vector.multi_reduction <maximumf>, %0, %cst [1] : vector<64x128xf32> to vector<64xf32>
    %3 = vector.shape_cast %2 : vector<64xf32> to vector<64x1xf32>
    %4 = vector.broadcast %3 : vector<64x1xf32> to vector<64x128xf32>
    %5 = arith.subf %0, %4 : vector<64x128xf32>
    %6 = math.exp %5 : vector<64x128xf32>
    %cst_3 = arith.constant dense<0.000000e+00> : vector<64xf32>
    %7 = vector.multi_reduction <add>, %6, %cst_3 [1] : vector<64x128xf32> to vector<64xf32>
    %8 = vector.shape_cast %7 : vector<64xf32> to vector<64x1xf32>
    %9 = tpu.iota {dimensions = array<i32: 1>} : vector<1x128xi32>
    %10 = vector.broadcast %9 : vector<1x128xi32> to vector<64x128xi32>
    %11 = vector.broadcast %1 : vector<64x1xi32> to vector<64x128xi32>
    %12 = arith.cmpi eq, %10, %11 : vector<64x128xi32>
    %cst_4 = arith.constant 0.000000e+00 : f32
    %13 = vector.broadcast %cst_4 : f32 to vector<64x128xf32>
    %14 = arith.select %12, %0, %13 : vector<64x128xi1>, vector<64x128xf32>
    %cst_5 = arith.constant dense<0.000000e+00> : vector<64xf32>
    %15 = vector.multi_reduction <add>, %14, %cst_5 [1] : vector<64x128xf32> to vector<64xf32>
    %16 = vector.shape_cast %15 : vector<64xf32> to vector<64x1xf32>
    %17 = math.log %8 : vector<64x1xf32>
    %18 = arith.addf %3, %17 : vector<64x1xf32>
    %19 = arith.subf %18, %16 : vector<64x1xf32>
    %cst_6 = arith.constant 0.000000e+00 : f32
    %20 = vector.broadcast %cst_6 : f32 to vector<64x1xf32>
    %21 = arith.maximumf %19, %20 : vector<64x1xf32>
    %cst_7 = arith.constant 0.000000e+00 : f32
    %22 = vector.broadcast %cst_7 : f32 to vector<64x1xf32>
    %23 = arith.subf %22, %21 : vector<64x1xf32>
    %24 = math.exp %23 : vector<64x1xf32>
    %cst_8 = arith.constant 1.000000e+00 : f32
    %25 = vector.broadcast %cst_8 : f32 to vector<64x1xf32>
    %26 = arith.subf %25, %24 : vector<64x1xf32>
    %27 = arith.mulf %26, %26 : vector<64x1xf32>
    %28 = arith.mulf %27, %21 : vector<64x1xf32>
    %c64_i32 = arith.constant 64 : i32
    %29 = arith.muli %arg0, %c64_i32 : i32
    %30 = tpu.iota {dimensions = array<i32: 0>} : vector<64x1xi32>
    %31 = vector.broadcast %29 : i32 to vector<64x1xi32>
    %32 = arith.addi %31, %30 : vector<64x1xi32>
    %c200_i32 = arith.constant 200 : i32
    %33 = vector.broadcast %c200_i32 : i32 to vector<64x1xi32>
    %34 = arith.cmpi slt, %32, %33 : vector<64x1xi32>
    %cst_9 = arith.constant 0.000000e+00 : f32
    %35 = vector.broadcast %cst_9 : f32 to vector<64x1xf32>
    %36 = arith.select %34, %28, %35 : vector<64x1xi1>, vector<64x1xf32>
    %37 = vector.shape_cast %36 : vector<64x1xf32> to vector<1x64x1xf32>
    %cst_10 = arith.constant dense<0.000000e+00> : vector<1xf32>
    %38 = vector.multi_reduction <add>, %37, %cst_10 [1, 2] : vector<1x64x1xf32> to vector<1xf32>
    %39 = vector.shape_cast %38 : vector<1xf32> to vector<1x1x1xf32>
    %40 = vector.extract %39[0, 0, 0] : f32 from vector<1x1x1xf32>
    %41 = vector.broadcast %40 : f32 to vector<1x8x128xf32>
    %c0_11 = arith.constant 0 : index
    %c0_12 = arith.constant 0 : index
    %c0_13 = arith.constant 0 : index
    %42 = vector.load %arg3[%c0_11, %c0_12, %c0_13] : memref<1x8x128xf32, #tpu.memory_space<vmem>>, vector<1x8x128xf32>
    tpu.vector_store %arg3[%c0_11, %c0_12, %c0_13], %41 {strides = array<i32>} : memref<1x8x128xf32, #tpu.memory_space<vmem>>, vector<1x8x128xf32>,
    return
  }
  func.func @transform_0(%arg0: i32) -> (i32, i32) {
    %c0_i32 = arith.constant 0 : i32
    %c0_i32_0 = arith.constant 0 : i32
    return %arg0, %c0_i32 : i32, i32
  }
  func.func @transform_1(%arg0: i32) -> (i32, i32) {
    %c0_i32 = arith.constant 0 : i32
    %c0_i32_0 = arith.constant 0 : i32
    return %arg0, %c0_i32 : i32, i32
  }
  func.func @transform_2(%arg0: i32) -> (i32, i32, i32) {
    %c0_i32 = arith.constant 0 : i32
    %c0_i32_0 = arith.constant 0 : i32
    %c0_i32_1 = arith.constant 0 : i32
    return %arg0, %c0_i32, %c0_i32_0 : i32, i32, i32
  }
}

</mosaic_0001>

<llo_original>
// kernel: tpu_custom_call.1
$region0: #{tpu_custom_call.1}
  #allocation0 [shape = 'u32[]', space=smem, size = 0x4, offset = 0x4, fixed_abs, tag = 'smem constant byte address 0x4 - core index']
  #allocation1 [shape = 'u32[72,128]{1,0:T(1,128)}', space=vmem, size = 0x9000, scoped, tag = 'internal scratch']
  %s0 = inlined_call_operand.vmem [shape: f32[200,128], index: 0, kind: input, shape index: {}]
  %s1 = inlined_call_operand.vmem [shape: s32[200,1], index: 1, kind: input, shape index: {}]
  %s2 = inlined_call_operand.hbm [shape: f32[4,8,128], index: 2, kind: output, shape index: {}]
  %s3 = sld [smem:[#allocation0]]
  $region41: #{tpu_custom_call.1} parent=0
    _
  %s5 = ssub.s32 1, %s3
  %s6 = scalar_select 0, %s5, %s3
  $region1: #{tpu_custom_call.1} parent=0
    #allocation2 [shape = 'u8[8192]{0}', space=vmem, size = 0x2000, scoped, tag = 'output window, operand 0']
    #allocation3 [shape = 's32[2]{0}', space=sflag, size = 0x8, scoped, tag = 'scoped memory for tpu_custom_call.1']
    %7 = vsyncpa [#allocation3], 0
    %s8 = scalar_lea.sflag [#allocation3], 1
    %9 = vsyncpa %s8, 0
    loop: start=0, step=1, limit=6
    $region2: #{tpu_custom_call.1} parent=1 // loop_pre_header
      _
    $region3: #{tpu_custom_call.1} parent=1 // loop_header
      %s11 = sphi 0, %s15
      %p12 = scmp.ge.s32.totalorder %s11, 6
      %s21 = sphi 0, %s23
      %s24 = sphi 0, %s21
      %s25 = sphi 0, %s24
      %s41 = sphi 0, %s25
      %s47 = sphi 0, %s49
      %s50 = sphi 0, %s47
      %s51 = sphi 0, %s50
      %s67 = sphi 0, %s51
      %s73 = sphi 0, %s75
      %s76 = sphi 0, %s73
      %s77 = sphi 0, %s76
      %s93 = sphi 0, %s77
    $region4: #{tpu_custom_call.1} parent=1 // loop_header_branch
      %14 = sbr.rel (%p12) target = $region8
    $region5: #{tpu_custom_call.1} parent=1 // loop_body
      %s16 = ssub.s32 %s11, 1
      %s17 = ssub.s32 %s11, 2
      %s18 = sadd.s32 %s11, 1
      %s19 = ssub.s32 %s11, %s18
      %p20 = scmp.eq.s32.totalorder %s19, 0
      %s22 = sadd.s32 %s21, 1
      %s23 = scalar_select %p20, %s21, %s22
      %p26 = pneg %p20
      %p27 = scmp.eq.s32.totalorder %s11, 3
      %p28 = por %p26, %p27
      %p29 = scmp.ne.s32.totalorder %s21, %s24
      %p30 = scmp.eq.s32.totalorder %s11, 0
      %p31 = por %p29, %p30
      %p32 = scmp.ne.s32.totalorder %s21, %s24
      %p33 = scmp.eq.s32.totalorder %s16, 3
      %p34 = por %p32, %p33
      %p35 = scmp.ne.s32.totalorder %s24, %s25
      %p36 = scmp.eq.s32.totalorder %s16, 0
      %p37 = por %p35, %p36
      %p38 = scmp.ne.s32.totalorder %s24, %s25
      %p39 = scmp.eq.s32.totalorder %s17, 3
      %p40 = por %p38, %p39
      %p42 = scmp.ne.s32.totalorder %s25, %s41
      %p43 = scmp.eq.s32.totalorder %s17, 0
      %p44 = por %p42, %p43
      %s45 = ssub.s32 %s11, %s18
      %p46 = scmp.eq.s32.totalorder %s45, 0
      %s48 = sadd.s32 %s47, 1
      %s49 = scalar_select %p46, %s47, %s48
      %p52 = pneg %p46
      %p53 = scmp.eq.s32.totalorder %s11, 3
      %p54 = por %p52, %p53
      %p55 = scmp.ne.s32.totalorder %s47, %s50
      %p56 = scmp.eq.s32.totalorder %s11, 0
      %p57 = por %p55, %p56
      %p58 = scmp.ne.s32.totalorder %s47, %s50
      %p59 = scmp.eq.s32.totalorder %s16, 3
      %p60 = por %p58, %p59
      %p61 = scmp.ne.s32.totalorder %s50, %s51
      %p62 = scmp.eq.s32.totalorder %s16, 0
      %p63 = por %p61, %p62
      %p64 = scmp.ne.s32.totalorder %s50, %s51
      %p65 = scmp.eq.s32.totalorder %s17, 3
      %p66 = por %p64, %p65
      %p68 = scmp.ne.s32.totalorder %s51, %s67
      %p69 = scmp.eq.s32.totalorder %s17, 0
      %p70 = por %p68, %p69
      %s71 = ssub.s32 %s11, %s18
      %p72 = scmp.eq.s32.totalorder %s71, 0
      %s74 = sadd.s32 %s73, 1
      %s75 = scalar_select %p72, %s73, %s74
      %p78 = pneg %p72
      %p79 = scmp.eq.s32.totalorder %s11, 3
      %p80 = por %p78, %p79
      %p81 = scmp.ne.s32.totalorder %s73, %s76
      %p82 = scmp.eq.s32.totalorder %s11, 0
      %p83 = por %p81, %p82
      %p84 = scmp.ne.s32.totalorder %s73, %s76
      %p85 = scmp.eq.s32.totalorder %s16, 3
      %p86 = por %p84, %p85
      %p87 = scmp.ne.s32.totalorder %s76, %s77
      %p88 = scmp.eq.s32.totalorder %s16, 0
      %p89 = por %p87, %p88
      %p90 = scmp.ne.s32.totalorder %s76, %s77
      %p91 = scmp.eq.s32.totalorder %s17, 3
      %p92 = por %p90, %p91
      %p94 = scmp.ne.s32.totalorder %s77, %s93
      %p95 = scmp.eq.s32.totalorder %s17, 0
      %p96 = por %p94, %p95
      %p97 = scmp.le.s32.totalorder 1, %s11
      %p98 = scmp.lt.s32.totalorder %s11, 5
      %p99 = pnand %p97, %p98
      %p100 = pneg %p99
      // Predicated region
      $region9: #{tpu_custom_call.1} parent=5 // pred_check
        _
      $region10: #{tpu_custom_call.1} parent=5 // pred_check_branch
        %102 = sbr.rel (%p99) target = $region12
      $region11: #{tpu_custom_call.1} parent=5 // pred_region
        %s103 = ssub.s32 %s11, 1
      $region12: #{tpu_custom_call.1} parent=5 // pred_fallthru
        _
      %p104 = scmp.lt.s32.totalorder %s11, 4
      // Predicated region
      $region13: #{tpu_custom_call.1} parent=5 // pred_check
        %p105 = pneg %p104
      $region14: #{tpu_custom_call.1} parent=5 // pred_check_branch
        %107 = sbr.rel (%p105) target = $region16
      $region15: #{tpu_custom_call.1} parent=5 // pred_region
        // Predicated region
        $region17: #{tpu_custom_call.1} parent=15 // pred_check
          %p108 = pneg %p31
        $region18: #{tpu_custom_call.1} parent=15 // pred_check_branch
          %110 = sbr.rel (%p108) target = $region20
        $region19: #{tpu_custom_call.1} parent=15 // pred_region
          %s111 = smul.u32 8, %s11
          %s112 = ssub.s32 25, %s111
          %p113 = scmp.lt.s32.totalorder %s112, 8
          %s114 = scalar_select %p113, %s112, 8
          %s115 = smul.u32 8, %s114
          %p116 = scmp.lt.s32.totalorder %s111, 24
          %s117 = scalar_select %p116, %s111, 24
          %s118 = smul.addr %s117, 8
          %s119 = scalar_lea.vmem %s0, %s118
          %s120 = smul.u32 8, %s11
          %s121 = ssub.s32 25, %s120
          %p122 = scmp.lt.s32.totalorder %s121, 8
          %s123 = scalar_select %p122, %s121, 8
          %s124 = smul.u32 8, %s123
        $region20: #{tpu_custom_call.1} parent=15 // pred_fallthru
          _
        // Predicated region
        $region21: #{tpu_custom_call.1} parent=15 // pred_check
          %p125 = pneg %p57
        $region22: #{tpu_custom_call.1} parent=15 // pred_check_branch
          %127 = sbr.rel (%p125) target = $region24
        $region23: #{tpu_custom_call.1} parent=15 // pred_region
          %s128 = smul.u32 8, %s11
          %s129 = ssub.s32 25, %s128
          %p130 = scmp.lt.s32.totalorder %s129, 8
          %s131 = scalar_select %p130, %s129, 8
          %s132 = smul.u32 8, %s131
          %p133 = scmp.lt.s32.totalorder %s128, 24
          %s134 = scalar_select %p133, %s128, 24
          %s135 = smul.addr %s134, 8
          %s136 = scalar_lea.vmem %s1, %s135
          %s137 = smul.u32 8, %s11
          %s138 = ssub.s32 25, %s137
          %p139 = scmp.lt.s32.totalorder %s138, 8
          %s140 = scalar_select %p139, %s138, 8
          %s141 = smul.u32 8, %s140
        $region24: #{tpu_custom_call.1} parent=15 // pred_fallthru
          _
      $region16: #{tpu_custom_call.1} parent=5 // pred_fallthru
        _
      %p142 = scmp.le.s32.totalorder 1, %s11
      %p143 = scmp.lt.s32.totalorder %s11, 5
      %p144 = pnand %p142, %p143
      %p145 = pneg %p144
      // Predicated region
      $region25: #{tpu_custom_call.1} parent=5 // pred_check
        _
      $region26: #{tpu_custom_call.1} parent=5 // pred_check_branch
        %147 = sbr.rel (%p144) target = $region28
      $region27: #{tpu_custom_call.1} parent=5 // pred_region
        %s148 = ssub.s32 %s11, 1
        %s149 = smul.u32 8, %s16
        %s150 = ssub.s32 25, %s149
        %p151 = scmp.lt.s32.totalorder %s150, 8
        %s152 = scalar_select %p151, %s150, 8
        %s153 = smul.u32 8, %s152
        %p154 = scmp.lt.s32.totalorder %s149, 24
        %s155 = scalar_select %p154, %s149, 24
        %s156 = smul.addr %s155, 8
        %s157 = scalar_lea.vmem %s0, %s156
        %p158 = pneg %p37
        %p159 = pneg %p34
        %s160 = smul.u32 8, %s16
        %s161 = ssub.s32 25, %s160
        %p162 = scmp.lt.s32.totalorder %s161, 8
        %s163 = scalar_select %p162, %s161, 8
        %s164 = smul.u32 8, %s163
        %p165 = scmp.lt.s32.totalorder %s160, 24
        %s166 = scalar_select %p165, %s160, 24
        %s167 = smul.addr %s166, 8
        %s168 = scalar_lea.vmem %s1, %s167
        %p169 = pneg %p63
        %p170 = pneg %p60
        %p171 = pneg %p89
        %p172 = pneg %p86
        %s173 = sand.u32 %s76, 1
        %s174 = scalar_lea.sflag [#allocation3], %s173
        %s175 = sand.u32 %s76, 1
        %s176 = smul.addr %s175, 8
        %s177 = scalar_lea.vmem [#allocation2], %s176
        %s178 = smul.u32 8, %s16
        %s179 = ssub.s32 25, %s178
        %p180 = scmp.lt.s32.totalorder %s179, 8
        %s181 = scalar_select %p180, %s179, 8
        %s182 = smul.u32 8, %s181
        %p183 = scmp.lt.s32.totalorder %s178, 24
        %s184 = scalar_select %p183, %s178, 24
        %s185 = smul.addr %s184, 8
        %s186 = scalar_lea.vmem %s0, %s185
        %s187 = smul.u32 8, %s16
        %s188 = ssub.s32 25, %s187
        %p189 = scmp.lt.s32.totalorder %s188, 8
        %s190 = scalar_select %p189, %s188, 8
        %s191 = smul.u32 8, %s190
        %s192 = smul.u32 8, %s16
        %s193 = ssub.s32 25, %s192
        %p194 = scmp.lt.s32.totalorder %s193, 8
        %s195 = scalar_select %p194, %s193, 8
        %s196 = smul.u32 8, %s195
        %p197 = scmp.lt.s32.totalorder %s192, 24
        %s198 = scalar_select %p197, %s192, 24
        %s199 = smul.addr %s198, 8
        %s200 = scalar_lea.vmem %s1, %s199
        %s201 = smul.u32 8, %s16
        %s202 = ssub.s32 25, %s201
        %p203 = scmp.lt.s32.totalorder %s202, 8
        %s204 = scalar_select %p203, %s202, 8
        %s205 = smul.u32 8, %s204
        %v206 = vld [vmem:[%s186] sm:$0xff]
        %v207 = vld [vmem:[%s186 + $0x8] sm:$0xff]
        %v208 = vld [vmem:[%s186 + $0x10] sm:$0xff]
        %v209 = vld [vmem:[%s186 + $0x18] sm:$0xff]
        %v210 = vld [vmem:[%s186 + $0x20] sm:$0xff]
        %v211 = vld [vmem:[%s186 + $0x28] sm:$0xff]
        %v212 = vld [vmem:[%s186 + $0x30] sm:$0xff]
        %v213 = vld [vmem:[%s186 + $0x38] sm:$0xff]
        %v214 = vld [vmem:[%s200] sm:$0xff]
        %v215 = vld [vmem:[%s200 + $0x8] sm:$0xff]
        %v216 = vld [vmem:[%s200 + $0x10] sm:$0xff]
        %v217 = vld [vmem:[%s200 + $0x18] sm:$0xff]
        %v218 = vld [vmem:[%s200 + $0x20] sm:$0xff]
        %v219 = vld [vmem:[%s200 + $0x28] sm:$0xff]
        %v220 = vld [vmem:[%s200 + $0x30] sm:$0xff]
        %v221 = vld [vmem:[%s200 + $0x38] sm:$0xff]
        %222 = vmax.xlane.f32.xlu0 %v206
        %v223 = vpop.xlane.xlu0 %222
        %224 = vmax.xlane.f32.xlu0 %v207
        %v225 = vpop.xlane.xlu0 %224
        %226 = vmax.xlane.f32.xlu0 %v208
        %v227 = vpop.xlane.xlu0 %226
        %228 = vmax.xlane.f32.xlu0 %v209
        %v229 = vpop.xlane.xlu0 %228
        %230 = vmax.xlane.f32.xlu0 %v210
        %v231 = vpop.xlane.xlu0 %230
        %232 = vmax.xlane.f32.xlu0 %v211
        %v233 = vpop.xlane.xlu0 %232
        %234 = vmax.xlane.f32.xlu0 %v212
        %v235 = vpop.xlane.xlu0 %234
        %236 = vmax.xlane.f32.xlu0 %v213
        %v237 = vpop.xlane.xlu0 %236
        %v238 = vsub.f32 %v206, %v223
        %v239 = vsub.f32 %v207, %v225
        %v240 = vsub.f32 %v208, %v227
        %v241 = vsub.f32 %v209, %v229
        %v242 = vsub.f32 %v210, %v231
        %v243 = vsub.f32 %v211, %v233
        %v244 = vsub.f32 %v212, %v235
        %v245 = vsub.f32 %v213, %v237
        %v246 = vmul.f32 %v238, 1.442695
        %v247 = vpow.pop %v246
        %v248 = vmul.f32 %v239, 1.442695
        %v249 = vpow.pop %v248
        %v250 = vmul.f32 %v240, 1.442695
        %v251 = vpow.pop %v250
        %v252 = vmul.f32 %v241, 1.442695
        %v253 = vpow.pop %v252
        %v254 = vmul.f32 %v242, 1.442695
        %v255 = vpow.pop %v254
        %v256 = vmul.f32 %v243, 1.442695
        %v257 = vpow.pop %v256
        %v258 = vmul.f32 %v244, 1.442695
        %v259 = vpow.pop %v258
        %v260 = vmul.f32 %v245, 1.442695
        %v261 = vpow.pop %v260
        %262 = vadd.xlane.f32.xlu0 %v247
        %v263 = vpop.xlane.xlu0 %262
        %264 = vadd.xlane.f32.xlu0 %v249
        %v265 = vpop.xlane.xlu0 %264
        %266 = vadd.xlane.f32.xlu0 %v251
        %v267 = vpop.xlane.xlu0 %266
        %268 = vadd.xlane.f32.xlu0 %v253
        %v269 = vpop.xlane.xlu0 %268
        %270 = vadd.xlane.f32.xlu0 %v255
        %v271 = vpop.xlane.xlu0 %270
        %272 = vadd.xlane.f32.xlu0 %v257
        %v273 = vpop.xlane.xlu0 %272
        %274 = vadd.xlane.f32.xlu0 %v259
        %v275 = vpop.xlane.xlu0 %274
        %276 = vadd.xlane.f32.xlu0 %v261
        %v277 = vpop.xlane.xlu0 %276
        %v278 = vlaneseq
        %v279 = vand.u32 %v278, 127
        %280 = vset.pattern.permute.xlu0 0
        %281 = vperm.xlu0 %280, %v214
        %v282 = vpop.permute.xlu0 %281
        %283 = vset.pattern.permute.xlu0 0
        %284 = vperm.xlu0 %283, %v215
        %v285 = vpop.permute.xlu0 %284
        %286 = vset.pattern.permute.xlu0 0
        %287 = vperm.xlu0 %286, %v216
        %v288 = vpop.permute.xlu0 %287
        %289 = vset.pattern.permute.xlu0 0
        %290 = vperm.xlu0 %289, %v217
        %v291 = vpop.permute.xlu0 %290
        %292 = vset.pattern.permute.xlu0 0
        %293 = vperm.xlu0 %292, %v218
        %v294 = vpop.permute.xlu0 %293
        %295 = vset.pattern.permute.xlu0 0
        %296 = vperm.xlu0 %295, %v219
        %v297 = vpop.permute.xlu0 %296
        %298 = vset.pattern.permute.xlu0 0
        %299 = vperm.xlu0 %298, %v220
        %v300 = vpop.permute.xlu0 %299
        %301 = vset.pattern.permute.xlu0 0
        %302 = vperm.xlu0 %301, %v221
        %v303 = vpop.permute.xlu0 %302
        %vm304 = vcmp.eq.s32.totalorder %v279, %v282
        %vm305 = vcmp.eq.s32.totalorder %v279, %v285
        %vm306 = vcmp.eq.s32.totalorder %v279, %v288
        %vm307 = vcmp.eq.s32.totalorder %v279, %v291
        %vm308 = vcmp.eq.s32.totalorder %v279, %v294
        %vm309 = vcmp.eq.s32.totalorder %v279, %v297
        %vm310 = vcmp.eq.s32.totalorder %v279, %v300
        %vm311 = vcmp.eq.s32.totalorder %v279, %v303
        %v312 = vsel %vm304, %v206, 0.0
        %v313 = vsel %vm305, %v207, 0.0
        %v314 = vsel %vm306, %v208, 0.0
        %v315 = vsel %vm307, %v209, 0.0
        %v316 = vsel %vm308, %v210, 0.0
        %v317 = vsel %vm309, %v211, 0.0
        %v318 = vsel %vm310, %v212, 0.0
        %v319 = vsel %vm311, %v213, 0.0
        %320 = vadd.xlane.f32.xlu0 %v312
        %v321 = vpop.xlane.xlu0 %320
        %322 = vadd.xlane.f32.xlu0 %v313
        %v323 = vpop.xlane.xlu0 %322
        %324 = vadd.xlane.f32.xlu0 %v314
        %v325 = vpop.xlane.xlu0 %324
        %326 = vadd.xlane.f32.xlu0 %v315
        %v327 = vpop.xlane.xlu0 %326
        %328 = vadd.xlane.f32.xlu0 %v316
        %v329 = vpop.xlane.xlu0 %328
        %330 = vadd.xlane.f32.xlu0 %v317
        %v331 = vpop.xlane.xlu0 %330
        %332 = vadd.xlane.f32.xlu0 %v318
        %v333 = vpop.xlane.xlu0 %332
        %334 = vadd.xlane.f32.xlu0 %v319
        %v335 = vpop.xlane.xlu0 %334
        %v336 = vlog2.pop %v263
        %v337 = vmul.f32 %v336, 0.6931472
        %v338 = vlog2.pop %v265
        %v339 = vmul.f32 %v338, 0.6931472
        %v340 = vlog2.pop %v267
        %v341 = vmul.f32 %v340, 0.6931472
        %v342 = vlog2.pop %v269
        %v343 = vmul.f32 %v342, 0.6931472
        %v344 = vlog2.pop %v271
        %v345 = vmul.f32 %v344, 0.6931472
        %v346 = vlog2.pop %v273
        %v347 = vmul.f32 %v346, 0.6931472
        %v348 = vlog2.pop %v275
        %v349 = vmul.f32 %v348, 0.6931472
        %v350 = vlog2.pop %v277
        %v351 = vmul.f32 %v350, 0.6931472
        %v352 = vadd.f32 %v223, %v337
        %v353 = vadd.f32 %v225, %v339
        %v354 = vadd.f32 %v227, %v341
        %v355 = vadd.f32 %v229, %v343
        %v356 = vadd.f32 %v231, %v345
        %v357 = vadd.f32 %v233, %v347
        %v358 = vadd.f32 %v235, %v349
        %v359 = vadd.f32 %v237, %v351
        %v360 = vsub.f32 %v352, %v321
        %v361 = vsub.f32 %v353, %v323
        %v362 = vsub.f32 %v354, %v325
        %v363 = vsub.f32 %v355, %v327
        %v364 = vsub.f32 %v356, %v329
        %v365 = vsub.f32 %v357, %v331
        %v366 = vsub.f32 %v358, %v333
        %v367 = vsub.f32 %v359, %v335
        %v368 = vmax.f32 %v360, 0.0
        %v369 = vmax.f32 %v361, 0.0
        %v370 = vmax.f32 %v362, 0.0
        %v371 = vmax.f32 %v363, 0.0
        %v372 = vmax.f32 %v364, 0.0
        %v373 = vmax.f32 %v365, 0.0
        %v374 = vmax.f32 %v366, 0.0
        %v375 = vmax.f32 %v367, 0.0
        %v376 = vsub.f32 0.0, %v368
        %v377 = vsub.f32 0.0, %v369
        %v378 = vsub.f32 0.0, %v370
        %v379 = vsub.f32 0.0, %v371
        %v380 = vsub.f32 0.0, %v372
        %v381 = vsub.f32 0.0, %v373
        %v382 = vsub.f32 0.0, %v374
        %v383 = vsub.f32 0.0, %v375
        %v384 = vmul.f32 %v376, 1.442695
        %v385 = vpow.pop %v384
        %v386 = vmul.f32 %v377, 1.442695
        %v387 = vpow.pop %v386
        %v388 = vmul.f32 %v378, 1.442695
        %v389 = vpow.pop %v388
        %v390 = vmul.f32 %v379, 1.442695
        %v391 = vpow.pop %v390
        %v392 = vmul.f32 %v380, 1.442695
        %v393 = vpow.pop %v392
        %v394 = vmul.f32 %v381, 1.442695
        %v395 = vpow.pop %v394
        %v396 = vmul.f32 %v382, 1.442695
        %v397 = vpow.pop %v396
        %v398 = vmul.f32 %v383, 1.442695
        %v399 = vpow.pop %v398
        %v400 = vsub.f32 1.0, %v385
        %v401 = vsub.f32 1.0, %v387
        %v402 = vsub.f32 1.0, %v389
        %v403 = vsub.f32 1.0, %v391
        %v404 = vsub.f32 1.0, %v393
        %v405 = vsub.f32 1.0, %v395
        %v406 = vsub.f32 1.0, %v397
        %v407 = vsub.f32 1.0, %v399
        %v408 = vmul.f32 %v400, %v400
        %v409 = vmul.f32 %v401, %v401
        %v410 = vmul.f32 %v402, %v402
        %v411 = vmul.f32 %v403, %v403
        %v412 = vmul.f32 %v404, %v404
        %v413 = vmul.f32 %v405, %v405
        %v414 = vmul.f32 %v406, %v406
        %v415 = vmul.f32 %v407, %v407
        %v416 = vmul.f32 %v408, %v368
        %v417 = vmul.f32 %v409, %v369
        %v418 = vmul.f32 %v410, %v370
        %v419 = vmul.f32 %v411, %v371
        %v420 = vmul.f32 %v412, %v372
        %v421 = vmul.f32 %v413, %v373
        %v422 = vmul.f32 %v414, %v374
        %v423 = vmul.f32 %v415, %v375
        %s424 = smul.u32 %s16, 64
        %v425 = vlaneseq
        %v426 = vshrl.u32 %v425, 7
        %v427 = vadd.s32 %v426, 8
        %v428 = vadd.s32 %v426, 16
        %v429 = vadd.s32 %v426, 24
        %v430 = vadd.s32 %v426, 32
        %v431 = vadd.s32 %v426, 40
        %v432 = vadd.s32 %v426, 48
        %v433 = vadd.s32 %v426, 56
        %v434 = vstv %s424
        %v435 = vadd.s32 %v434, %v426
        %v436 = vadd.s32 %v434, %v427
        %v437 = vadd.s32 %v434, %v428
        %v438 = vadd.s32 %v434, %v429
        %v439 = vadd.s32 %v434, %v430
        %v440 = vadd.s32 %v434, %v431
        %v441 = vadd.s32 %v434, %v432
        %v442 = vadd.s32 %v434, %v433
        %vm443 = vcmp.lt.s32.totalorder %v435, 200
        %vm444 = vcmp.lt.s32.totalorder %v436, 200
        %vm445 = vcmp.lt.s32.totalorder %v437, 200
        %vm446 = vcmp.lt.s32.totalorder %v438, 200
        %vm447 = vcmp.lt.s32.totalorder %v439, 200
        %vm448 = vcmp.lt.s32.totalorder %v440, 200
        %vm449 = vcmp.lt.s32.totalorder %v441, 200
        %vm450 = vcmp.lt.s32.totalorder %v442, 200
        %v451 = vsel %vm443, %v416, 0.0
        %v452 = vsel %vm444, %v417, 0.0
        %v453 = vsel %vm445, %v418, 0.0
        %v454 = vsel %vm446, %v419, 0.0
        %v455 = vsel %vm447, %v420, 0.0
        %v456 = vsel %vm448, %v421, 0.0
        %v457 = vsel %vm449, %v422, 0.0
        %v458 = vsel %vm450, %v423, 0.0
        %vm459 = vcmask 7168
        %v460 = vsel %vm459, %v451, 0.0
        %v461 = vsel %vm459, %v452, 0.0
        %v462 = vadd.f32 %v460, %v461
        %v463 = vsel %vm459, %v453, 0.0
        %v464 = vadd.f32 %v462, %v463
        %v465 = vsel %vm459, %v454, 0.0
        %v466 = vadd.f32 %v464, %v465
        %v467 = vsel %vm459, %v455, 0.0
        %v468 = vadd.f32 %v466, %v467
        %v469 = vsel %vm459, %v456, 0.0
        %v470 = vadd.f32 %v468, %v469
        %v471 = vsel %vm459, %v457, 0.0
        %v472 = vadd.f32 %v470, %v471
        %v473 = vsel %vm459, %v458, 0.0
        %v474 = vadd.f32 %v472, %v473
        %475 = vadd.xlane.f32.xlu0 %v474
        %v476 = vpop.xlane.xlu0 %475
        %v477 = vrot.slane %v476, 4
        %v478 = vadd.f32 %v476, %v477
        %v479 = vrot.slane %v478, 2
        %v480 = vadd.f32 %v478, %v479
        %v481 = vrot.slane %v480, 1
        %v482 = vadd.f32 %v480, %v481
        %s483 = vtos %v482
        %v484 = vstv %s483
        %485 = vst [vmem:[%s177] sm:$0xff] %v484
        %s486 = sand.u32 %s76, 1
        %s487 = scalar_lea.sflag [#allocation3], %s486
        %s488 = sand.u32 %s76, 1
        %s489 = smul.addr %s488, 8
        %s490 = scalar_lea.vmem [#allocation2], %s489
        // Predicated region
        $region29: #{tpu_custom_call.1} parent=27 // pred_check
          %p491 = pneg %p86
        $region30: #{tpu_custom_call.1} parent=27 // pred_check_branch
          %493 = sbr.rel (%p491) target = $region32
        $region31: #{tpu_custom_call.1} parent=27 // pred_region
          %495 = vsyncadd %s487, 0
          %s496 = smul.addr %s16, 8
          %s497 = scalar_lea.hbm %s2, %s496
          %s499 = sshll.u32 %s490, 4
          %s500 = int_to_ptr.vmem [resolvable:$true] %s499
          %s501 = sshll.u32 %s497, 4
          %s502 = int_to_ptr.hbm [resolvable:$true] %s501
          %504 = dma.vmem_to_hbm [thread:$0]  %s500, 128, %s502, %s487
        $region32: #{tpu_custom_call.1} parent=27 // pred_fallthru
          _
      $region28: #{tpu_custom_call.1} parent=5 // pred_fallthru
        _
      %p505 = scmp.le.s32.totalorder 2, %s11
      // Predicated region
      $region33: #{tpu_custom_call.1} parent=5 // pred_check
        %p506 = pneg %p505
      $region34: #{tpu_custom_call.1} parent=5 // pred_check_branch
        %508 = sbr.rel (%p506) target = $region36
      $region35: #{tpu_custom_call.1} parent=5 // pred_region
        %s509 = ssub.s32 %s11, 2
        // Predicated region
        $region37: #{tpu_custom_call.1} parent=35 // pred_check
          %p510 = pneg %p92
        $region38: #{tpu_custom_call.1} parent=35 // pred_check_branch
          %512 = sbr.rel (%p510) target = $region40
        $region39: #{tpu_custom_call.1} parent=35 // pred_region
          %s513 = sand.u32 %s77, 1
          %s514 = scalar_lea.sflag [#allocation3], %s513
          %s515 = sand.u32 %s77, 1
          %s516 = smul.addr %s515, 8
          %s517 = scalar_lea.vmem [#allocation2], %s516
          %519 = dma.done %s514, 128
        $region40: #{tpu_custom_call.1} parent=35 // pred_fallthru
          _
      $region36: #{tpu_custom_call.1} parent=5 // pred_fallthru
        _
    $region6: #{tpu_custom_call.1} parent=1 // loop_footer
      %s15 = sadd.s32 1, %s11
    $region7: #{tpu_custom_call.1} parent=1 // loop_footer_branch
      %10 = sbr.rel target = $region3
    $region8: #{tpu_custom_call.1} parent=1 // loop_exit
      _
    %520 = vsyncpa [#allocation3], 1
    %s521 = scalar_lea.sflag [#allocation3], 1
    %522 = vsyncpa %s521, 1

</llo_original>
